<compile_context>
chip_gen: v7x
topology: tpu7x:2x2x1
jax: 0.10.0
libtpu: 0.0.40
codegen_flags: <defaults>
</compile_context>

<pallas_src>
import functools
import math

import jax
import jax.numpy as jnp
from jax.experimental import pallas as pl
from jax.experimental.pallas import tpu as pltpu


def _round_fsq_kernel(z_ref, q_ref, idx_ref):
    """Elementwise hot path: round + integer cast, all in VMEM / VPU."""
    z = z_ref[...]
    q = jnp.round(z)                        # round-half-to-even == torch.round
    q_ref[...] = q.astype(q_ref.dtype)
    idx_ref[...] = q.astype(idx_ref.dtype)


# ~4 MiB of f32 per tile buffer: 6 live buffers (1 in + 2 out, double-buffered)
# => ~24 MiB VMEM; vmem_limit_bytes raises the scoped limit so this also fits
# v5e's 16 MiB default (physical VMEM is 128/128/64 MiB on v5e/v6e/v7x).
_TARGET_TILE_ELEMS = 1024 * 1024
_VMEM_LIMIT_BYTES = 48 * 1024 * 1024
_LANE_WIDTHS = (4096, 2048, 1024, 512, 256, 128)


def _lane_dense_view(total: int):
    """(rows, lane_width, pad_elems) for a lane-dense 2-D view of `total` elems.

    lane_width is always a multiple of 128 so every output store is a
    full-width unmasked vst; if `total` is not a multiple of 128 we pad the
    flattened stream up to a multiple of 1024 (one full (8, 128) tile).
    """
    for w in _LANE_WIDTHS:
        if total % w == 0:
            return total // w, w, 0
    padded = ((total + 1023) // 1024) * 1024
    for w in _LANE_WIDTHS:
        if padded % w == 0:
            return padded // w, w, padded - total
    raise AssertionError("unreachable: padded total is a multiple of 1024")


def _pick_tile_rows(rows: int, target: int) -> int:
    """Row-tile size: multiple of 8 (or the full extent), a divisor of `rows`
    when possible (no ragged masked final block), and yielding >=2 grid steps
    when the extent allows it so v7x's two TensorCores both get work."""
    if rows <= target:
        if rows >= 16 and rows % 16 == 0:
            return rows // 2                # 2 even steps for megacore sharding
        return rows                         # full extent => always a legal block
    t = max(8, (target // 8) * 8)
    for cand in range(t, 7, -8):            # largest multiple-of-8 divisor <= target
        if rows % cand == 0:
            return cand
    return t                                # accept a ragged final block


def _round_fsq_impl(z2d, index_dtype, donate):
    rows, w = z2d.shape
    target = max(8, (_TARGET_TILE_ELEMS // w) // 8 * 8)
    tile_rows = _pick_tile_rows(rows, target)
    grid = (pl.cdiv(rows, tile_rows),)

    elem_bytes = z2d.dtype.itemsize
    idx_bytes = jnp.dtype(index_dtype).itemsize
    cost = pl.CostEstimate(
        flops=rows * w,
        transcendentals=0,
        bytes_accessed=rows * w * (2 * elem_bytes + idx_bytes),
    )

    return pl.pallas_call(
        _round_fsq_kernel,
        out_shape=(
            jax.ShapeDtypeStruct((rows, w), z2d.dtype),
            jax.ShapeDtypeStruct((rows, w), index_dtype),
        ),
        grid=grid,
        in_specs=[pl.BlockSpec((tile_rows, w), lambda i: (i, 0))],
        out_specs=(
            pl.BlockSpec((tile_rows, w), lambda i: (i, 0)),
            pl.BlockSpec((tile_rows, w), lambda i: (i, 0)),
        ),
        compiler_params=pltpu.CompilerParams(
            dimension_semantics=("parallel",),   # shard rows across TCs on v7x
            vmem_limit_bytes=_VMEM_LIMIT_BYTES,
        ),
        cost_estimate=cost,
        input_output_aliases=({0: 0} if donate else {}),
    )(z2d)


@functools.partial(jax.custom_vjp, nondiff_argnums=(1, 2))
def _round_fsq_2d(z2d, index_dtype, donate):
    return _round_fsq_impl(z2d, index_dtype, donate)


def _round_fsq_2d_fwd(z2d, index_dtype, donate):
    return _round_fsq_impl(z2d, index_dtype, donate), None


def _round_fsq_2d_bwd(index_dtype, donate, _residuals, cotangents):
    g_q, _g_idx = cotangents
    return (g_q,)            # straight-through: d round_ste(z) / dz == identity


_round_fsq_2d.defvjp(_round_fsq_2d_fwd, _round_fsq_2d_bwd)


class RoundFSQ:
    """JAX/Pallas re-implementation of the PyTorch RoundFSQ module."""

    def __init__(self, latent_dim: int, dither: bool = False, *,
                 index_dtype=jnp.int32, donate_input: bool = False):
        self.latent_dim = latent_dim
        self.dither = dither
        self.training = False            # eval mode by default (no dither noise)
        self.index_dtype = index_dtype
        self.donate_input = donate_input

    def __call__(self, z, skip_tanh: bool = False):
        # skip_tanh is accepted but unused — exactly like the reference forward().
        del skip_tanh
        assert z.shape[-1] == self.latent_dim, (
            f"Expected last dim={self.latent_dim}, got {z.shape[-1]}")
        if self.training and self.dither:
            # TODO(synk): training-mode dither (z + U(-0.5, 0.5)) not implemented in-kernel.
            raise NotImplementedError("training-mode dither is not implemented")

        orig_shape = z.shape
        total = math.prod(orig_shape)
        rows, w, pad = _lane_dense_view(total)

        zflat = z.reshape(total)
        if pad:
            zflat = jnp.pad(zflat, (0, pad))
        z2d = zflat.reshape(rows, w)

        q2d, idx2d = _round_fsq_2d(z2d, self.index_dtype, self.donate_input)

        if pad:
            q = q2d.reshape(rows * w)[:total].reshape(orig_shape)
            indices = idx2d.reshape(rows * w)[:total].reshape(orig_shape)
        else:
            q = q2d.reshape(orig_shape)
            indices = idx2d.reshape(orig_shape)
        # NOTE: torch returns int64 indices; int32 (default) halves that HBM
        # stream; FSQ level indices fit with enormous margin.
        return q, indices


if __name__ == "__main__":
    key = jax.random.PRNGKey(0)

    # Primary test: shapes consistent with the module (batch, seq, latent_dim).
    batch, seq, latent_dim = 2, 8, 32
    z = jax.random.normal(key, (batch, seq, latent_dim), dtype=jnp.float32) * 3.0

    fsq = RoundFSQ(latent_dim=latent_dim)
    q, indices = fsq(z)
    q = jax.block_until_ready(q)
    indices = jax.block_until_ready(indices)

    q_ref = jnp.round(z)
    assert q.shape == z.shape and q.dtype == z.dtype
    assert indices.shape == z.shape and indices.dtype == jnp.int32
    assert jnp.allclose(q, q_ref)
    assert jnp.array_equal(indices, q_ref.astype(jnp.int32))

    # Straight-through gradient: d(sum(q))/dz == 1 everywhere.
    g = jax.grad(lambda x: fsq(x)[0].sum())(z)
    assert jnp.allclose(jax.block_until_ready(g), jnp.ones_like(z))

    # Multi-block tiling test (rows=192 -> two even 96-row blocks at w=4096,
    # exercising the parallel grid axis / no ragged last block).
    z_big = jax.random.normal(jax.random.PRNGKey(1), (4, 6144, latent_dim),
                              dtype=jnp.float32) * 3.0
    q_big, idx_big = fsq(z_big)
    jax.block_until_ready((q_big, idx_big))
    assert jnp.allclose(q_big, jnp.round(z_big))
    assert jnp.array_equal(idx_big, jnp.round(z_big).astype(jnp.int32))

    # Non-128-divisible element count -> padded lane-dense path.
    fsq10 = RoundFSQ(latent_dim=10)
    z_odd = jax.random.normal(jax.random.PRNGKey(2), (3, 7, 10),
                              dtype=jnp.float32) * 3.0
    q_odd, idx_odd = fsq10(z_odd)
    jax.block_until_ready((q_odd, idx_odd))
    assert q_odd.shape == z_odd.shape and idx_odd.shape == z_odd.shape
    assert jnp.allclose(q_odd, jnp.round(z_odd))
    assert jnp.array_equal(idx_odd, jnp.round(z_odd).astype(jnp.int32))

    # Donated-input path: q aliases z's HBM buffer inside the jitted call.
    fsq_donate = RoundFSQ(latent_dim=latent_dim, donate_input=True)
    donated = jax.jit(lambda x: fsq_donate(x), donate_argnums=0)
    q_d, idx_d = donated(z + 0.0)
    jax.block_until_ready((q_d, idx_d))
    assert jnp.allclose(q_d, q_ref)
    assert jnp.array_equal(idx_d, q_ref.astype(jnp.int32))

    print("KERNEL_OK")
</pallas_src>

<mosaic_0001>
module attributes {stable_mosaic.version = 11 : i64} {
  func.func @_round_fsq_kernel(%arg0: i32, %arg1: memref<1x512xf32, #tpu.memory_space<vmem>>, %arg2: memref<1x512xf32, #tpu.memory_space<vmem>>, %arg3: memref<1x512xi32, #tpu.memory_space<vmem>>) attributes {dimension_semantics = [#tpu.dimension_semantics<parallel>], iteration_bounds = array<i64: 1>, scalar_prefetch = 0 : i64, scratch_operands = 0 : i64, tpu.core_type = #tpu.core_type<tc>, window_params = [{transform_indices = @transform_0, window_bounds = array<i64: 1, 512>}, {transform_indices = @transform_1, window_bounds = array<i64: 1, 512>}, {transform_indices = @transform_2, window_bounds = array<i64: 1, 512>}]} {
    %c0 = arith.constant 0 : index
    %c0_0 = arith.constant 0 : index
    %0 = vector.load %arg1[%c0, %c0_0] : memref<1x512xf32, #tpu.memory_space<vmem>>, vector<1x512xf32>
    %1 = math.roundeven %0 : vector<1x512xf32>
    %c0_1 = arith.constant 0 : index
    %c0_2 = arith.constant 0 : index
    %2 = vector.load %arg2[%c0_1, %c0_2] : memref<1x512xf32, #tpu.memory_space<vmem>>, vector<1x512xf32>
    tpu.vector_store %arg2[%c0_1, %c0_2], %1 {strides = array<i32>} : memref<1x512xf32, #tpu.memory_space<vmem>>, vector<1x512xf32>,
    %3 = arith.fptosi %1 : vector<1x512xf32> to vector<1x512xi32>
    %c0_3 = arith.constant 0 : index
    %c0_4 = arith.constant 0 : index
    %4 = vector.load %arg3[%c0_3, %c0_4] : memref<1x512xi32, #tpu.memory_space<vmem>>, vector<1x512xi32>
    tpu.vector_store %arg3[%c0_3, %c0_4], %3 {strides = array<i32>} : memref<1x512xi32, #tpu.memory_space<vmem>>, vector<1x512xi32>,
    return
  }
  func.func @transform_0(%arg0: i32) -> (i32, i32) {
    %c0_i32 = arith.constant 0 : i32
    %c0_i32_0 = arith.constant 0 : i32
    return %arg0, %c0_i32 : i32, i32
  }
  func.func @transform_1(%arg0: i32) -> (i32, i32) {
    %c0_i32 = arith.constant 0 : i32
    %c0_i32_0 = arith.constant 0 : i32
    return %arg0, %c0_i32 : i32, i32
  }
  func.func @transform_2(%arg0: i32) -> (i32, i32) {
    %c0_i32 = arith.constant 0 : i32
    %c0_i32_0 = arith.constant 0 : i32
    return %arg0, %c0_i32 : i32, i32
  }
}

</mosaic_0001>

<llo_original>
// kernel: tpu_custom_call.1
$region0: #{tpu_custom_call.1}
  #allocation0 [shape = 'u32[]', space=smem, size = 0x4, offset = 0x4, fixed_abs, tag = 'smem constant byte address 0x4 - core index']
  #allocation1 [shape = 'u32[144,128]{1,0:T(1,128)}', space=vmem, size = 0x12000, scoped, tag = 'internal scratch']
  %s0 = inlined_call_operand.hbm [shape: f32[1,512], index: 0, kind: input, shape index: {}]
  %s1 = inlined_call_operand.hbm [shape: f32[1,512], index: 1, kind: output, shape index: {0}]
  %s2 = inlined_call_operand.hbm [shape: s32[1,512], index: 2, kind: output, shape index: {1}]
  %3 = xla_tuple %s1, %s2
  %s4 = sld [smem:[#allocation0]]
  $region26: #{tpu_custom_call.1} parent=0
    _
  %s6 = ssub.s32 1, %s4
  %s7 = scalar_select 0, %s6, %s4
  $region1: #{tpu_custom_call.1} parent=0
    #allocation2 [shape = 'u8[2048]{0}', space=vmem, size = 0x800, scoped, tag = 'input window, operand 0, single buffered']
    #allocation3 [shape = 's32[1]{0}', space=sflag, size = 0x4, scoped, tag = 'scoped memory for tpu_custom_call.1']
    #allocation4 [shape = 's32[1]{0}', space=sflag, size = 0x4, scoped, tag = 'scoped memory for tpu_custom_call.1']
    #allocation5 [shape = 'u8[2048]{0}', space=vmem, size = 0x800, scoped, tag = 'output window, operand 0, single buffered']
    #allocation6 [shape = 'u8[2048]{0}', space=vmem, size = 0x800, scoped, tag = 'output window, operand 1, single buffered']
    #allocation7 [shape = 's32[1]{0}', space=sflag, size = 0x4, scoped, tag = 'scoped memory for tpu_custom_call.1']
    %8 = vsyncpa [#allocation3], 0
    %9 = vsyncpa [#allocation4], 0
    %10 = vsyncpa [#allocation7], 0
    // Predicated region
    $region2: #{tpu_custom_call.1} parent=1 // pred_check
      _
    $region3: #{tpu_custom_call.1} parent=1 // pred_check_branch
      %12 = sbr.rel (0) target = $region5
    $region4: #{tpu_custom_call.1} parent=1 // pred_region
      %s14 = ssub.s32 64, 64
      %15 = vsyncadd [#allocation3], %s14
      %s17 = sshll.u32 [#allocation2], 4
      %s18 = int_to_ptr.vmem [resolvable:$true] %s17
      %20 = dma.hbm_to_vmem [thread:$0]  %s0, 64, %s18, [#allocation3]
    $region5: #{tpu_custom_call.1} parent=1 // pred_fallthru
      _
    // Predicated region
    $region6: #{tpu_custom_call.1} parent=1 // pred_check
      _
    $region7: #{tpu_custom_call.1} parent=1 // pred_check_branch
      %22 = sbr.rel (0) target = $region9
    $region8: #{tpu_custom_call.1} parent=1 // pred_region
      %23 = dma.done [#allocation3], 64
    $region9: #{tpu_custom_call.1} parent=1 // pred_fallthru
      _
    %v24 = vld [vmem:[#allocation2] sm:$0xf]
    %v25 = vround.ne.pseudo %v24
    %v26 = vlaneseq
    %vm27 = vcmp.ge.s32.totalorder %v26, 0
    %vm28 = vcmp.lt.s32.totalorder %v26, 512
    %vm29 = vmand %vm27, %vm28
    %30 = vst.msk [vmem:[#allocation5] sm:$0xf] %vm29, %v25
    %v31 = vcvt.f32.s32.ties.to.even %v24
    %32 = vst.msk [vmem:[#allocation6] sm:$0xf] %vm29, %v31
    // Predicated region
    $region10: #{tpu_custom_call.1} parent=1 // pred_check
      _
    $region11: #{tpu_custom_call.1} parent=1 // pred_check_branch
      %34 = sbr.rel (0) target = $region13
    $region12: #{tpu_custom_call.1} parent=1 // pred_region
      %s36 = ssub.s32 64, 64
      %37 = vsyncadd [#allocation4], %s36
      %s39 = sshll.u32 [#allocation5], 4
      %s40 = int_to_ptr.vmem [resolvable:$true] %s39
      %42 = dma.vmem_to_hbm [thread:$0]  %s40, 64, %s1, [#allocation4]
    $region13: #{tpu_custom_call.1} parent=1 // pred_fallthru
      _
    // Predicated region
    $region14: #{tpu_custom_call.1} parent=1 // pred_check
      _
    $region15: #{tpu_custom_call.1} parent=1 // pred_check_branch
      %44 = sbr.rel (0) target = $region17
    $region16: #{tpu_custom_call.1} parent=1 // pred_region
      %s46 = ssub.s32 64, 64
      %47 = vsyncadd [#allocation7], %s46
      %s49 = sshll.u32 [#allocation6], 4
      %s50 = int_to_ptr.vmem [resolvable:$true] %s49
      %52 = dma.vmem_to_hbm [thread:$0]  %s50, 64, %s2, [#allocation7]
    $region17: #{tpu_custom_call.1} parent=1 // pred_fallthru
      _
    // Predicated region
    $region18: #{tpu_custom_call.1} parent=1 // pred_check
      _
    $region19: #{tpu_custom_call.1} parent=1 // pred_check_branch
      %54 = sbr.rel (0) target = $region21
    $region20: #{tpu_custom_call.1} parent=1 // pred_region
      %55 = dma.done [#allocation4], 64
    $region21: #{tpu_custom_call.1} parent=1 // pred_fallthru
      _
    // Predicated region
    $region22: #{tpu_custom_call.1} parent=1 // pred_check
      _
    $region23: #{tpu_custom_call.1} parent=1 // pred_check_branch
      %57 = sbr.rel (0) target = $region25
    $region24: #{tpu_custom_call.1} parent=1 // pred_region
      %58 = dma.done [#allocation7], 64
    $region25: #{tpu_custom_call.1} parent=1 // pred_fallthru
      _
    %59 = vsyncpa [#allocation3], 1
    %60 = vsyncpa [#allocation4], 1
    %61 = vsyncpa [#allocation7], 1

</llo_original>
